<compile_context>
chip_gen: v7x
topology: tpu7x:2x2x1
jax: 0.10.0
libtpu: 0.0.40
codegen_flags: <defaults>
</compile_context>

<pallas_src>
import jax
import jax.numpy as jnp
from jax import lax
from jax.experimental import pallas as pl
from jax.experimental.pallas import tpu as pltpu


def _round_down_to(x: int, m: int) -> int:
    return (x // m) * m


def _num_tensorcores() -> int:
    # v5e / v6e have one TensorCore per chip; v7x has two.  The leading
    # "parallel" grid axis only pays off with >1 core, so detect it here
    # (falling back to 1, which is always correct).
    try:
        kind = jax.devices()[0].device_kind.lower()
    except Exception:
        return 1
    return 2 if "v7" in kind else 1


def _make_mse_kernel(B, D, tb, td, blocks_per_split, need_row_mask, need_col_mask):
    """Build the kernel body (all shape parameters are static Python ints)."""

    def kernel(sim_ref, tgt_ref, out_ref, acc_ref):
        c = pl.program_id(0)   # core / split index   ("parallel")
        i = pl.program_id(1)   # row-block index      ("arbitrary")
        j = pl.program_id(2)   # feature-block index  ("arbitrary")

        @pl.when(jnp.logical_and(i == 0, j == 0))
        def _():
            acc_ref[...] = jnp.zeros_like(acc_ref)

        diff = sim_ref[...].astype(jnp.float32) - tgt_ref[...].astype(jnp.float32)

        # Masks are built from a sublane-only (tb, 1) iota and a lane-only
        # (1, td) iota compared against a per-block scalar bound, so interior
        # blocks pay only a couple of cheap VPU ops and almost no vreg
        # pressure.  Masking `diff` before squaring also neutralizes any
        # garbage (NaN/inf) read from partial tail blocks.
        if need_row_mask:
            row0 = (c * blocks_per_split + i) * tb          # logical (unclamped)
            row_ok = lax.broadcasted_iota(jnp.int32, (tb, 1), 0) < (B - row0)
            diff = jnp.where(row_ok, diff, 0.0)
        if need_col_mask:
            col_ok = lax.broadcasted_iota(jnp.int32, (1, td), 1) < (D - j * td)
            diff = jnp.where(col_ok, diff, 0.0)

        sq = diff * diff

        # Fold the (tb, td) tile into the (8, td) accumulator using only
        # element-wise vreg adds (sublane-aligned groups of 8 rows).
        ng = tb // 8
        rem = tb - ng * 8
        if ng > 1:
            acc_ref[...] += jnp.sum(sq[: ng * 8].reshape(ng, 8, td), axis=0)
        elif ng == 1:
            acc_ref[...] += sq[:8]
        if rem > 0:
            acc_ref[:rem, :] += sq[ng * 8:, :]

        # Single cross-lane/cross-sublane reduce per split, on the last step.
        @pl.when(jnp.logical_and(i == pl.num_programs(1) - 1,
                                 j == pl.num_programs(2) - 1))
        def _():
            out_ref[0, 0] = jnp.sum(acc_ref[...])

    return kernel


def custom_loss(
    similarity: jax.Array,
    targets: jax.Array,
    *,
    target_block_bytes: int = 6 * 1024 * 1024,
    num_splits: int | None = None,
    small_input_fast_path: bool = True,
) -> jax.Array:
    """Pallas equivalent of CustomLoss.forward: mean((similarity - targets)**2)."""
    assert similarity.shape == targets.shape

    # Flatten to 2-D (rows, features): the loss is a mean over all elements.
    if similarity.ndim == 0:
        similarity = similarity.reshape(1, 1)
        targets = targets.reshape(1, 1)
    elif similarity.ndim == 1:
        similarity = similarity.reshape(1, -1)
        targets = targets.reshape(1, -1)
    elif similarity.ndim > 2:
        similarity = similarity.reshape(-1, similarity.shape[-1])
        targets = targets.reshape(-1, targets.shape[-1])

    B, D = similarity.shape
    total_elems = B * D
    itemsize = jnp.dtype(similarity.dtype).itemsize

    # Fast path: for tiny inputs the fixed pallas_call launch + grid
    # bookkeeping dominates; the fused XLA reduction is strictly faster there.
    if small_input_fast_path and total_elems * itemsize < 256 * 1024:
        diff = similarity.astype(jnp.float32) - targets.astype(jnp.float32)
        return jnp.sum(diff * diff) / jnp.float32(total_elems)

    # --- block sizing (dtype-aware) -------------------------------------
    sub = 8 * max(1, 4 // itemsize)            # 8 for f32, 16 for bf16, 32 for int8/fp8
    budget = min(max(target_block_bytes, sub * 128 * itemsize), 8 * 1024 * 1024)
    row_bytes = D * itemsize

    if sub * row_bytes <= budget:
        # One block spans the full feature dim; use as many rows as fit.
        td = D
        nd = 1
        target_rows = max(sub, _round_down_to(budget // row_bytes, sub))
        tb = B if B <= target_rows else target_rows
        need_col_mask = False
    else:
        # Very wide rows: tile the feature dim (multiples of 128 lanes) so the
        # pipeline stays double-buffered inside every generation's VMEM.
        td = max(128, _round_down_to(budget // (sub * itemsize), 128))
        nd = pl.cdiv(D, td)
        tb = B if B <= sub else sub
        need_col_mask = (nd * td) != D

    nb = pl.cdiv(B, tb)

    # --- split across TensorCores (only where it exists) ----------------
    if num_splits is None:
        num_splits = _num_tensorcores()
    num_splits = max(1, min(num_splits, nb))
    blocks_per_split = pl.cdiv(nb, num_splits)
    need_row_mask = (num_splits * blocks_per_split * tb) != B

    kernel = _make_mse_kernel(B, D, tb, td, blocks_per_split,
                              need_row_mask, need_col_mask)

    def in_index_map(c, i, j):
        # Clamp so DMAs never start past the last (possibly partial) block;
        # logically out-of-range rows are masked to zero inside the kernel.
        blk = c * blocks_per_split + i
        return (jnp.minimum(blk, nb - 1), j)

    block_bytes = tb * td * itemsize
    acc_bytes = 8 * td * 4
    # 2 inputs x 2 pipeline buffers + accumulator, with headroom; stays under
    # v7x's 64 MiB/TC and well under v5e/v6e's 128 MiB.
    vmem_limit = min(64 * 1024 * 1024,
                     max(48 * 1024 * 1024,
                         4 * block_bytes + 2 * acc_bytes + 4 * 1024 * 1024))

    partials = pl.pallas_call(
        kernel,
        out_shape=jax.ShapeDtypeStruct((num_splits, 1), jnp.float32),
        grid_spec=pltpu.PrefetchScalarGridSpec(
            num_scalar_prefetch=0,
            grid=(num_splits, blocks_per_split, nd),
            in_specs=[
                pl.BlockSpec((tb, td), in_index_map),
                pl.BlockSpec((tb, td), in_index_map),
            ],
            out_specs=pl.BlockSpec(
                (1, 1), lambda c, i, j: (c, 0),
                memory_space=pltpu.MemorySpace.SMEM,
            ),
            scratch_shapes=[pltpu.VMEM((8, td), jnp.float32)],
        ),
        compiler_params=pltpu.CompilerParams(
            dimension_semantics=("parallel", "arbitrary", "arbitrary"),
            vmem_limit_bytes=vmem_limit,
        ),
    )(similarity, targets)

    # Combine per-core partial sums and normalize in the wrapper.
    # TODO(synk): result is returned in f32 (torch would return the input
    # dtype for e.g. bf16 inputs); f32 is the more useful training-loss dtype.
    return jnp.sum(partials) / jnp.float32(total_elems)


if __name__ == "__main__":
    key = jax.random.PRNGKey(0)

    def check(B, D, dtype=jnp.float32, rtol=1e-5, **kw):
        k1, k2 = jax.random.split(jax.random.fold_in(key, B * 131 + D))
        sim = jax.random.normal(k1, (B, D), dtype=jnp.float32).astype(dtype)
        tgt = jax.random.normal(k2, (B, D), dtype=jnp.float32).astype(dtype)
        loss = custom_loss(sim, tgt, **kw)
        jax.block_until_ready(loss)
        ref = jnp.mean((sim.astype(jnp.float32) - tgt.astype(jnp.float32)) ** 2)
        assert jnp.allclose(loss, ref, rtol=rtol, atol=1e-6), (B, D, dtype, loss, ref)
        return loss

    # Small shape consistent with the module: similarity / targets of shape (B, D).
    check(16, 128, small_input_fast_path=False)                  # single-block Pallas path
    # Non-multiple-of-8 rows and non-128 feature dim (full-extent block path).
    check(5, 96, small_input_fast_path=False)
    # Multi row-block path with row masking (tiny block budget forces tiling).
    check(100, 128, small_input_fast_path=False, target_block_bytes=8 * 1024)
    # Feature-dim tiling path with column masking.
    check(40, 300, small_input_fast_path=False, target_block_bytes=4 * 1024)
    # bf16 inputs: dtype-aware (16,128)-aligned row tiles.
    check(33, 256, dtype=jnp.bfloat16, rtol=2e-5,
          small_input_fast_path=False, target_block_bytes=8 * 1024)
    # Tiny-input XLA fast path (no pallas_call launch).
    check(16, 128)

    print("KERNEL_OK")
</pallas_src>

<mosaic_0001>
module attributes {stable_mosaic.version = 11 : i64} {
  func.func @kernel(%arg0: i32, %arg1: i32, %arg2: i32, %arg3: memref<16x128xf32, #tpu.memory_space<vmem>>, %arg4: memref<16x128xf32, #tpu.memory_space<vmem>>, %arg5: memref<1x1xf32, #tpu.memory_space<smem>>, %arg6: memref<8x128xf32, #tpu.memory_space<vmem>>) attributes {dimension_semantics = [#tpu.dimension_semantics<parallel>, #tpu.dimension_semantics<arbitrary>, #tpu.dimension_semantics<arbitrary>], iteration_bounds = array<i64: 1, 1, 1>, scalar_prefetch = 0 : i64, scratch_operands = 1 : i64, tpu.core_type = #tpu.core_type<tc>, window_params = [{transform_indices = @transform_0, window_bounds = array<i64: 16, 128>}, {transform_indices = @transform_1, window_bounds = array<i64: 16, 128>}, {transform_indices = @transform_2, window_bounds = array<i64: 1, 1>}]} {
    %c0_i32 = arith.constant 0 : i32
    %0 = arith.cmpi eq, %arg1, %c0_i32 : i32
    %c0_i32_0 = arith.constant 0 : i32
    %1 = arith.cmpi eq, %arg2, %c0_i32_0 : i32
    %2 = arith.andi %0, %1 : i1
    %3 = arith.extui %2 : i1 to i32
    %c0_i32_1 = arith.constant 0 : i32
    %4 = arith.cmpi ne, %3, %c0_i32_1 : i32
    scf.if %4 {
      %cst_12 = arith.constant 0.000000e+00 : f32
      %19 = vector.broadcast %cst_12 : f32 to vector<8x128xf32>
      %c0_13 = arith.constant 0 : index
      %c0_14 = arith.constant 0 : index
      %20 = vector.load %arg6[%c0_13, %c0_14] : memref<8x128xf32, #tpu.memory_space<vmem>>, vector<8x128xf32>
      tpu.vector_store %arg6[%c0_13, %c0_14], %19 {strides = array<i32>} : memref<8x128xf32, #tpu.memory_space<vmem>>, vector<8x128xf32>,
    } else {
    }
    %c0 = arith.constant 0 : index
    %c0_2 = arith.constant 0 : index
    %5 = vector.load %arg3[%c0, %c0_2] : memref<16x128xf32, #tpu.memory_space<vmem>>, vector<16x128xf32>
    %c0_3 = arith.constant 0 : index
    %c0_4 = arith.constant 0 : index
    %6 = vector.load %arg4[%c0_3, %c0_4] : memref<16x128xf32, #tpu.memory_space<vmem>>, vector<16x128xf32>
    %7 = arith.subf %5, %6 : vector<16x128xf32>
    %8 = arith.mulf %7, %7 : vector<16x128xf32>
    %c0_5 = arith.constant 0 : index
    %c0_6 = arith.constant 0 : index
    %9 = vector.load %arg6[%c0_5, %c0_6] : memref<8x128xf32, #tpu.memory_space<vmem>>, vector<8x128xf32>
    %10 = vector.shape_cast %8 : vector<16x128xf32> to vector<2x8x128xf32>
    %cst = arith.constant dense<0.000000e+00> : vector<8x128xf32>
    %11 = vector.multi_reduction <add>, %10, %cst [0] : vector<2x8x128xf32> to vector<8x128xf32>
    %12 = arith.addf %9, %11 : vector<8x128xf32>
    %c0_7 = arith.constant 0 : index
    %c0_8 = arith.constant 0 : index
    %13 = vector.load %arg6[%c0_7, %c0_8] : memref<8x128xf32, #tpu.memory_space<vmem>>, vector<8x128xf32>
    tpu.vector_store %arg6[%c0_7, %c0_8], %12 {strides = array<i32>} : memref<8x128xf32, #tpu.memory_space<vmem>>, vector<8x128xf32>,
    %c0_i32_9 = arith.constant 0 : i32
    %14 = arith.cmpi eq, %arg1, %c0_i32_9 : i32
    %c0_i32_10 = arith.constant 0 : i32
    %15 = arith.cmpi eq, %arg2, %c0_i32_10 : i32
    %16 = arith.andi %14, %15 : i1
    %17 = arith.extui %16 : i1 to i32
    %c0_i32_11 = arith.constant 0 : i32
    %18 = arith.cmpi ne, %17, %c0_i32_11 : i32
    scf.if %18 {
      %c0_12 = arith.constant 0 : index
      %c0_13 = arith.constant 0 : index
      %19 = vector.load %arg6[%c0_12, %c0_13] : memref<8x128xf32, #tpu.memory_space<vmem>>, vector<8x128xf32>
      %20 = vector.shape_cast %19 : vector<8x128xf32> to vector<1x8x128xf32>
      %cst_14 = arith.constant dense<0.000000e+00> : vector<1xf32>
      %21 = vector.multi_reduction <add>, %20, %cst_14 [1, 2] : vector<1x8x128xf32> to vector<1xf32>
      %22 = vector.shape_cast %21 : vector<1xf32> to vector<1x1x1xf32>
      %23 = vector.extract %22[0, 0, 0] : f32 from vector<1x1x1xf32>
      %c0_15 = arith.constant 0 : index
      %c0_16 = arith.constant 0 : index
      %24 = memref.load %arg5[%c0_15, %c0_16] : memref<1x1xf32, #tpu.memory_space<smem>>
      memref.store %23, %arg5[%c0_15, %c0_16] : memref<1x1xf32, #tpu.memory_space<smem>>
    } else {
    }
    return
  }
  func.func @transform_0(%arg0: i32, %arg1: i32, %arg2: i32) -> (i32, i32) {
    %c1_i32 = arith.constant 1 : i32
    %0 = arith.muli %arg0, %c1_i32 : i32
    %1 = arith.addi %0, %arg1 : i32
    %c0_i32 = arith.constant 0 : i32
    %2 = arith.minsi %1, %c0_i32 : i32
    %c0_i32_0 = arith.constant 0 : i32
    return %2, %arg2 : i32, i32
  }
  func.func @transform_1(%arg0: i32, %arg1: i32, %arg2: i32) -> (i32, i32) {
    %c1_i32 = arith.constant 1 : i32
    %0 = arith.muli %arg0, %c1_i32 : i32
    %1 = arith.addi %0, %arg1 : i32
    %c0_i32 = arith.constant 0 : i32
    %2 = arith.minsi %1, %c0_i32 : i32
    %c0_i32_0 = arith.constant 0 : i32
    return %2, %arg2 : i32, i32
  }
  func.func @transform_2(%arg0: i32, %arg1: i32, %arg2: i32) -> (i32, i32) {
    %c0_i32 = arith.constant 0 : i32
    %c0_i32_0 = arith.constant 0 : i32
    return %arg0, %c0_i32 : i32, i32
  }
}

</mosaic_0001>

<llo_original>
// kernel: tpu_custom_call.1
$region0: #{tpu_custom_call.1}
  #allocation0 [shape = 'u32[]', space=smem, size = 0x4, offset = 0x4, fixed_abs, tag = 'smem constant byte address 0x4 - core index']
  #allocation1 [shape = 'u32[144,128]{1,0:T(1,128)}', space=vmem, size = 0x12000, scoped, tag = 'internal scratch']
  #allocation2 [shape = 'f32[8,128]{1,0:T(8,128)}', space=vmem, size = 0x1000, scoped, tag = 'scratch operand']
  %s0 = inlined_call_operand.hbm [shape: f32[16,128], index: 0, kind: input, shape index: {}]
  %s1 = inlined_call_operand.hbm [shape: f32[16,128], index: 1, kind: input, shape index: {}]
  %s2 = inlined_call_operand.hbm [shape: f32[1,1], index: 2, kind: output, shape index: {}]
  %s3 = sld [smem:[#allocation0]]
  $region34: #{tpu_custom_call.1} parent=0
    _
  %s5 = ssub.s32 1, %s3
  %s6 = scalar_select 0, %s5, %s3
  $region1: #{tpu_custom_call.1} parent=0
    #allocation3 [shape = 'u8[8192]{0}', space=vmem, size = 0x2000, scoped, tag = 'input window, operand 0, single buffered']
    #allocation4 [shape = 's32[1]{0}', space=sflag, size = 0x4, scoped, tag = 'scoped memory for tpu_custom_call.1']
    #allocation5 [shape = 's32[1]{0}', space=sflag, size = 0x4, scoped, tag = 'scoped memory for tpu_custom_call.1']
    #allocation6 [shape = 'u8[8192]{0}', space=vmem, size = 0x2000, scoped, tag = 'input window, operand 1, single buffered']
    #allocation7 [shape = 's32[1]{0}', space=sflag, size = 0x4, scoped, tag = 'scoped memory for tpu_custom_call.1']
    #allocation8 [shape = 'u8[512]{0}', space=smem, size = 0x200, scoped, tag = 'output window, operand 0, single buffered']
    %7 = vsyncpa [#allocation4], 0
    %8 = vsyncpa [#allocation7], 0
    %9 = vsyncpa [#allocation5], 0
    // Predicated region
    $region2: #{tpu_custom_call.1} parent=1 // pred_check
      _
    $region3: #{tpu_custom_call.1} parent=1 // pred_check_branch
      %11 = sbr.rel (0) target = $region5
    $region4: #{tpu_custom_call.1} parent=1 // pred_region
      %s12 = sadd.s32 0, 0
      %p13 = scmp.lt.s32.totalorder %s12, 0
      %s14 = scalar_select %p13, %s12, 0
      %s15 = smul.u32 2, %s14
      %s17 = ssub.s32 256, 256
      %18 = vsyncadd [#allocation4], %s17
      %s19 = smul.addr %s15, 128
      %s20 = scalar_lea.hbm %s0, %s19
      %s21 = sshll.u32 [#allocation3], 4
      %s22 = int_to_ptr.vmem [resolvable:$true] %s21
      %27 = dma.hbm_to_vmem [thread:$0]  %s20, 256, %s22, [#allocation4], 128, 128, 8
    $region5: #{tpu_custom_call.1} parent=1 // pred_fallthru
      _
    // Predicated region
    $region6: #{tpu_custom_call.1} parent=1 // pred_check
      _
    $region7: #{tpu_custom_call.1} parent=1 // pred_check_branch
      %29 = sbr.rel (0) target = $region9
    $region8: #{tpu_custom_call.1} parent=1 // pred_region
      %s30 = sadd.s32 0, 0
      %p31 = scmp.lt.s32.totalorder %s30, 0
      %s32 = scalar_select %p31, %s30, 0
      %s33 = smul.u32 2, %s32
      %s35 = ssub.s32 256, 256
      %36 = vsyncadd [#allocation7], %s35
      %s37 = smul.addr %s33, 128
      %s38 = scalar_lea.hbm %s1, %s37
      %s39 = sshll.u32 [#allocation6], 4
      %s40 = int_to_ptr.vmem [resolvable:$true] %s39
      %45 = dma.hbm_to_vmem [thread:$0]  %s38, 256, %s40, [#allocation7], 128, 128, 8
    $region9: #{tpu_custom_call.1} parent=1 // pred_fallthru
      _
    // Predicated region
    $region10: #{tpu_custom_call.1} parent=1 // pred_check
      _
    $region11: #{tpu_custom_call.1} parent=1 // pred_check_branch
      %47 = sbr.rel (0) target = $region13
    $region12: #{tpu_custom_call.1} parent=1 // pred_region
      %48 = dma.done [#allocation4], 256
    $region13: #{tpu_custom_call.1} parent=1 // pred_fallthru
      _
    // Predicated region
    $region14: #{tpu_custom_call.1} parent=1 // pred_check
      _
    $region15: #{tpu_custom_call.1} parent=1 // pred_check_branch
      %50 = sbr.rel (0) target = $region17
    $region16: #{tpu_custom_call.1} parent=1 // pred_region
      %51 = dma.done [#allocation7], 256
    $region17: #{tpu_custom_call.1} parent=1 // pred_fallthru
      _
    %s52 = sadd.s32 0, 0
    %p53 = scmp.lt.s32.totalorder %s52, 0
    %s54 = scalar_select %p53, %s52, 0
    %s55 = smul.u32 2, %s54
    %s56 = sadd.s32 0, 0
    %p57 = scmp.lt.s32.totalorder %s56, 0
    %s58 = scalar_select %p57, %s56, 0
    %s59 = smul.u32 2, %s58
    %p60 = scmp.eq.s32.totalorder 0, 0
    %p61 = scmp.eq.s32.totalorder 0, 0
    %p62 = pnand %p60, %p61
    %p63 = pneg %p62
    // Predicated region
    $region18: #{tpu_custom_call.1} parent=1 // pred_check
      _
    $region19: #{tpu_custom_call.1} parent=1 // pred_check_branch
      %65 = sbr.rel (%p62) target = $region21
    $region20: #{tpu_custom_call.1} parent=1 // pred_region
      %66 = vst [vmem:[#allocation2] sm:$0xff] 0.0
    $region21: #{tpu_custom_call.1} parent=1 // pred_fallthru
      _
    %v67 = vld [vmem:[#allocation3] sm:$0xff]
    %v68 = vld [vmem:[#allocation3 + $0x8] sm:$0xff]
    %v69 = vld [vmem:[#allocation6] sm:$0xff]
    %v70 = vld [vmem:[#allocation6 + $0x8] sm:$0xff]
    %v71 = vsub.f32 %v67, %v69
    %v72 = vsub.f32 %v68, %v70
    %v73 = vmul.f32 %v71, %v71
    %v74 = vmul.f32 %v72, %v72
    %v75 = vld [vmem:[#allocation2] sm:$0xff]
    %v76 = vadd.f32 %v73, %v74
    %v77 = vadd.f32 %v75, %v76
    %78 = vst [vmem:[#allocation2] sm:$0xff] %v77
    // Predicated region
    $region22: #{tpu_custom_call.1} parent=1 // pred_check
      _
    $region23: #{tpu_custom_call.1} parent=1 // pred_check_branch
      %80 = sbr.rel (%p62) target = $region25
    $region24: #{tpu_custom_call.1} parent=1 // pred_region
      %v81 = vld [vmem:[#allocation2] sm:$0xff]
      %82 = vadd.xlane.f32.xlu0 %v81
      %v83 = vpop.xlane.xlu0 %82
      %v84 = vrot.slane %v83, 4
      %v85 = vadd.f32 %v83, %v84
      %v86 = vrot.slane %v85, 2
      %v87 = vadd.f32 %v85, %v86
      %v88 = vrot.slane %v87, 1
      %v89 = vadd.f32 %v87, %v88
      %s90 = vtos %v89
      %s91 = scalar_lea.smem [#allocation8], 0
      %92 = sst [smem:[%s91]] %s90
    $region25: #{tpu_custom_call.1} parent=1 // pred_fallthru
      _
    // Predicated region
    $region26: #{tpu_custom_call.1} parent=1 // pred_check
      _
    $region27: #{tpu_custom_call.1} parent=1 // pred_check_branch
      %94 = sbr.rel (0) target = $region29
    $region28: #{tpu_custom_call.1} parent=1 // pred_region
      %s96 = ssub.s32 16, 16
      %97 = vsyncadd [#allocation5], %s96
      %100 = dma.smem_to_hbm [#allocation8], 16, %s2, [#allocation5]
    $region29: #{tpu_custom_call.1} parent=1 // pred_fallthru
      _
    // Predicated region
    $region30: #{tpu_custom_call.1} parent=1 // pred_check
      _
    $region31: #{tpu_custom_call.1} parent=1 // pred_check_branch
      %102 = sbr.rel (0) target = $region33
    $region32: #{tpu_custom_call.1} parent=1 // pred_region
      %103 = dma.done [#allocation5], 16
    $region33: #{tpu_custom_call.1} parent=1 // pred_fallthru
      _
    %104 = sfence
    %105 = vsyncpa [#allocation4], 1
    %106 = vsyncpa [#allocation7], 1
    %107 = vsyncpa [#allocation5], 1

</llo_original>
